<compile_context>
chip_gen: v6e
topology: v6e:2x2x1
jax: 0.10.0
libtpu: 0.0.40
codegen_flags: <defaults>
</compile_context>

<pallas_src>
import functools
import math

import jax
import jax.numpy as jnp
import numpy as np
from jax.experimental import pallas as pl
from jax.experimental.pallas import tpu as pltpu


def _attention_kernel(x_ref, w_qkv_ref, b_qkv_ref, w_proj_ref, b_proj_ref,
                      o_ref, *, num_heads):
    """One batch-block grid step.

    Block shapes seen by the kernel:
      x_ref     : (Bt, N, C)  bf16       w_qkv_ref : (C, 3C) bf16 (q cols pre-scaled)
      b_qkv_ref : (1, 3C)     f32        w_proj_ref: (C, C)  bf16
      b_proj_ref: (1, C)      f32        o_ref     : (Bt, N, C)
    """
    Bt, N, C = x_ref.shape
    rows = Bt * N
    hd = C // num_heads
    cdt = w_qkv_ref.dtype  # compute dtype (bf16)

    x = x_ref[...].reshape(rows, C)

    # Full-width QKV projection: one (rows, C) @ (C, 3C) MXU matmul per block.
    qkv = jnp.dot(x, w_qkv_ref[...], preferred_element_type=jnp.float32)
    qkv = (qkv + b_qkv_ref[...]).astype(cdt)                       # (rows, 3C)

    # Per-head attention; static unrolled loop, static lane-offset slices.
    ctx_parts = []
    for h in range(num_heads):
        q = qkv[:, h * hd:(h + 1) * hd].reshape(Bt, N, hd)          # pre-scaled
        k = qkv[:, C + h * hd:C + (h + 1) * hd].reshape(Bt, N, hd)
        v = qkv[:, 2 * C + h * hd:2 * C + (h + 1) * hd].reshape(Bt, N, hd)

        # q @ k^T via contraction over the trailing head_dim axis.
        logits = jnp.einsum('bnd,bmd->bnm', q, k,
                            preferred_element_type=jnp.float32)     # (Bt, N, N)

        # Numerically stable softmax in f32; EUP approx reciprocal for denom.
        logits = logits - jnp.max(logits, axis=-1, keepdims=True)
        p = jnp.exp(logits)
        p = p * pl.reciprocal(jnp.sum(p, axis=-1, keepdims=True), approx=True)

        ctx = jnp.einsum('bnm,bmd->bnd', p.astype(cdt), v,
                         preferred_element_type=jnp.float32)        # (Bt, N, hd)
        ctx_parts.append(ctx.reshape(rows, hd).astype(cdt))

    # Full-K output projection: concat heads along lanes, one (rows,C)@(C,C).
    ctx_full = jnp.concatenate(ctx_parts, axis=-1)                  # (rows, C) bf16
    out = jnp.dot(ctx_full, w_proj_ref[...],
                  preferred_element_type=jnp.float32) + b_proj_ref[...]
    o_ref[...] = out.reshape(Bt, N, C).astype(o_ref.dtype)


def _vmem_capacity_bytes():
    try:
        return int(pltpu.get_tpu_info().vmem_capacity_bytes)
    except Exception:
        return 128 * 1024 * 1024


def _vmem_limit_bytes():
    """Raise the scoped-VMEM limit above the ~32 MiB default, with headroom
    below physical capacity (64 MiB on v7x, 128 MiB on v5e/v6e)."""
    cap = _vmem_capacity_bytes()
    return int(min(cap * 3 // 4, 96 * 1024 * 1024))


def _choose_batch_block(B, N, *, target_rows=None, logits_budget=16 << 20):
    """Batch elements per grid step.

    Aim for Bt*N rows near an MXU/pipeline-friendly row count (512 on 64 MiB
    VMEM parts such as v7x, 1024 on 128 MiB v5e/v6e), keep >= 2 parallel grid
    steps when B > 1 (megacore), bound one head's (Bt, N, N) f32 logits block,
    and prefer an even number of parallel steps (v7x 2-TC sharding).
    """
    if target_rows is None:
        target_rows = 512 if _vmem_capacity_bytes() <= (64 << 20) else 1024

    divisors = [d for d in range(1, B + 1) if B % d == 0]

    def feasible(d):
        steps = B // d
        if steps < 2 and B > 1:
            return False
        if d * N > max(target_rows, N):
            return False
        if d * N * N * 4 > logits_budget:
            return False
        return True

    cands = [d for d in divisors if feasible(d)] or [1]
    return max(cands, key=lambda d: (((B // d) % 2 == 0) or (B // d) == 1, d))


def attention_forward(x, w_qkv, b_qkv, w_proj, b_proj, num_heads, *,
                      batch_block=None, compute_dtype=jnp.bfloat16):
    """x: (B, N, C); w_qkv: (C, 3C); b_qkv: (3C,); w_proj: (C, C); b_proj: (C,)."""
    B, N, C = x.shape
    assert C % num_heads == 0
    hd = C // num_heads
    scale = hd ** (-0.5)

    Bt = batch_block if batch_block is not None else _choose_batch_block(B, N)
    assert B % Bt == 0

    # Fold the softmax scale into the q columns (scale*q == x@(scale*Wq)+scale*bq),
    # then pre-cast activations / weights to the bf16 compute dtype (halves DMA
    # bytes and VMEM residency). Biases stay f32 for the f32 accumulation path.
    w_qkv_s = w_qkv.astype(jnp.float32).at[:, :C].multiply(scale)
    b_qkv_s = b_qkv.astype(jnp.float32).at[:C].multiply(scale).reshape(1, 3 * C)

    x_c = x.astype(compute_dtype)
    w_qkv_c = w_qkv_s.astype(compute_dtype)                 # (C, 3C)
    w_proj_c = w_proj.astype(compute_dtype)                 # (C, C)
    b_proj_2 = b_proj.astype(jnp.float32).reshape(1, C)

    # TODO(synk): if N is not a multiple of 128 (e.g. 196/197 ViT windows), pad
    # N in this wrapper and mask padded keys with -inf before the softmax for
    # lane-dense intermediates; not needed at these (full-dim block) shapes.

    kernel = functools.partial(_attention_kernel, num_heads=num_heads)

    return pl.pallas_call(
        kernel,
        out_shape=jax.ShapeDtypeStruct((B, N, C), x.dtype),
        grid_spec=pltpu.PrefetchScalarGridSpec(
            num_scalar_prefetch=0,
            grid=(B // Bt,),
            in_specs=[
                pl.BlockSpec((Bt, N, C), lambda b: (b, 0, 0)),     # x batch block
                pl.BlockSpec((C, 3 * C), lambda b: (0, 0)),        # Wqkv (resident)
                pl.BlockSpec((1, 3 * C), lambda b: (0, 0)),        # bqkv (resident)
                pl.BlockSpec((C, C), lambda b: (0, 0)),            # Wproj (resident)
                pl.BlockSpec((1, C), lambda b: (0, 0)),            # bproj (resident)
            ],
            out_specs=pl.BlockSpec((Bt, N, C), lambda b: (b, 0, 0)),
        ),
        compiler_params=pltpu.CompilerParams(
            dimension_semantics=("parallel",),
            vmem_limit_bytes=_vmem_limit_bytes(),
        ),
    )(x_c, w_qkv_c, b_qkv_s, w_proj_c, b_proj_2)


def attention_reference(x, w_qkv, b_qkv, w_proj, b_proj, num_heads):
    """Pure-JAX f32 reference mirroring the PyTorch forward exactly."""
    B, N, C = x.shape
    hd = C // num_heads
    scale = hd ** (-0.5)
    qkv = x @ w_qkv + b_qkv                                   # (B, N, 3C)
    qkv = qkv.reshape(B, N, 3, num_heads, hd).transpose(2, 0, 3, 1, 4)
    q, k, v = qkv[0], qkv[1], qkv[2]                          # (B, H, N, hd)
    attn = jnp.einsum('bhnd,bhmd->bhnm', q, k) * scale
    attn = jax.nn.softmax(attn, axis=-1)
    out = jnp.einsum('bhnm,bhmd->bhnd', attn, v)              # (B, H, N, hd)
    out = out.transpose(0, 2, 1, 3).reshape(B, N, C)
    return out @ w_proj + b_proj


if __name__ == "__main__":
    # Small shapes consistent with the module: B=2, N=8, C(dim)=32, heads=4.
    B, N, C = 2, 8, 32
    num_heads = 4

    key = jax.random.PRNGKey(0)
    kx, k1, k2, k3, k4 = jax.random.split(key, 5)

    x = jax.random.normal(kx, (B, N, C), dtype=jnp.float32)

    # Deterministic synthetic parameters (qkv_bias=True in the module).
    w_qkv = jax.random.normal(k1, (C, 3 * C), dtype=jnp.float32) / math.sqrt(C)
    b_qkv = 0.01 * jax.random.normal(k2, (3 * C,), dtype=jnp.float32)
    w_proj = jax.random.normal(k3, (C, C), dtype=jnp.float32) / math.sqrt(C)
    b_proj = 0.01 * jax.random.normal(k4, (C,), dtype=jnp.float32)

    out = attention_forward(x, w_qkv, b_qkv, w_proj, b_proj, num_heads)
    out = jax.block_until_ready(out)

    ref = attention_reference(x, w_qkv, b_qkv, w_proj, b_proj, num_heads)
    # bf16 MXU operands + approx reciprocal -> loosened tolerance (inference).
    np.testing.assert_allclose(np.asarray(out, dtype=np.float32),
                               np.asarray(ref), rtol=5e-2, atol=5e-2)

    print("KERNEL_OK")
</pallas_src>

<mosaic_0001>
module attributes {stable_mosaic.version = 11 : i64} {
  func.func @_attention_kernel(%arg0: i32, %arg1: memref<1x8x32xbf16, #tpu.memory_space<vmem>>, %arg2: memref<32x96xbf16, #tpu.memory_space<vmem>>, %arg3: memref<1x96xf32, #tpu.memory_space<vmem>>, %arg4: memref<32x32xbf16, #tpu.memory_space<vmem>>, %arg5: memref<1x32xf32, #tpu.memory_space<vmem>>, %arg6: memref<1x8x32xf32, #tpu.memory_space<vmem>>) attributes {dimension_semantics = [#tpu.dimension_semantics<parallel>], iteration_bounds = array<i64: 2>, scalar_prefetch = 0 : i64, scratch_operands = 0 : i64, tpu.core_type = #tpu.core_type<tc>, window_params = [{transform_indices = @transform_0, window_bounds = array<i64: 1, 8, 32>}, {pipeline_mode = #tpu.pipeline_mode<synchronous>, transform_indices = @transform_1, window_bounds = array<i64: 32, 96>}, {pipeline_mode = #tpu.pipeline_mode<synchronous>, transform_indices = @transform_2, window_bounds = array<i64: 1, 96>}, {pipeline_mode = #tpu.pipeline_mode<synchronous>, transform_indices = @transform_3, window_bounds = array<i64: 32, 32>}, {pipeline_mode = #tpu.pipeline_mode<synchronous>, transform_indices = @transform_4, window_bounds = array<i64: 1, 32>}, {transform_indices = @transform_5, window_bounds = array<i64: 1, 8, 32>}]} {
    %c0 = arith.constant 0 : index
    %c0_0 = arith.constant 0 : index
    %c0_1 = arith.constant 0 : index
    %0 = vector.load %arg1[%c0, %c0_0, %c0_1] : memref<1x8x32xbf16, #tpu.memory_space<vmem>>, vector<1x8x32xbf16>
    %1 = vector.shape_cast %0 : vector<1x8x32xbf16> to vector<8x32xbf16>
    %c0_2 = arith.constant 0 : index
    %c0_3 = arith.constant 0 : index
    %2 = vector.load %arg2[%c0_2, %c0_3] : memref<32x96xbf16, #tpu.memory_space<vmem>>, vector<32x96xbf16>
    %cst = arith.constant dense<0.000000e+00> : vector<8x96xf32>
    %3 = tpu.matmul %1, %2, %cst {dimension_numbers = #tpu.dot_dimension_numbers<[1], [0], [0], [1], [0, 0, 1, 1], [], []>} : vector<8x32xbf16>, vector<32x96xbf16>, vector<8x96xf32> -> vector<8x96xf32>
    %c0_4 = arith.constant 0 : index
    %c0_5 = arith.constant 0 : index
    %4 = vector.load %arg3[%c0_4, %c0_5] : memref<1x96xf32, #tpu.memory_space<vmem>>, vector<1x96xf32>
    %5 = vector.broadcast %4 : vector<1x96xf32> to vector<8x96xf32>
    %6 = arith.addf %3, %5 : vector<8x96xf32>
    %7 = arith.truncf %6 : vector<8x96xf32> to vector<8x96xbf16>
    %8 = vector.extract_strided_slice %7 {offsets = [0, 0], sizes = [8, 8], strides = [1, 1]} : vector<8x96xbf16> to vector<8x8xbf16>
    %9 = vector.shape_cast %8 : vector<8x8xbf16> to vector<1x8x8xbf16>
    %10 = vector.extract_strided_slice %7 {offsets = [0, 32], sizes = [8, 8], strides = [1, 1]} : vector<8x96xbf16> to vector<8x8xbf16>
    %11 = vector.shape_cast %10 : vector<8x8xbf16> to vector<1x8x8xbf16>
    %12 = vector.extract_strided_slice %7 {offsets = [0, 64], sizes = [8, 8], strides = [1, 1]} : vector<8x96xbf16> to vector<8x8xbf16>
    %13 = vector.shape_cast %12 : vector<8x8xbf16> to vector<1x8x8xbf16>
    "tpu.trace_start"() <{level = 10 : i32, message = "bnd,bmd->bnm"}> : () -> ()
    %cst_6 = arith.constant dense<0.000000e+00> : vector<1x8x8xf32>
    %14 = tpu.matmul %9, %11, %cst_6 {dimension_numbers = #tpu.dot_dimension_numbers<[2], [2], [1], [1], [0, 0, 0, 1, 1, 1], [0], [0]>} : vector<1x8x8xbf16>, vector<1x8x8xbf16>, vector<1x8x8xf32> -> vector<1x8x8xf32>
    "tpu.trace_stop"() : () -> ()
    %cst_7 = arith.constant dense<0xFF800000> : vector<1x8xf32>
    %15 = vector.multi_reduction <maximumf>, %14, %cst_7 [2] : vector<1x8x8xf32> to vector<1x8xf32>
    %16 = vector.shape_cast %15 : vector<1x8xf32> to vector<1x8x1xf32>
    %17 = vector.broadcast %16 : vector<1x8x1xf32> to vector<1x8x8xf32>
    %18 = arith.subf %14, %17 : vector<1x8x8xf32>
    %19 = math.exp %18 : vector<1x8x8xf32>
    %cst_8 = arith.constant dense<0.000000e+00> : vector<1x8xf32>
    %20 = vector.multi_reduction <add>, %19, %cst_8 [2] : vector<1x8x8xf32> to vector<1x8xf32>
    %21 = vector.shape_cast %20 : vector<1x8xf32> to vector<1x8x1xf32>
    %22 = tpu.reciprocal %21 {approx = true} : vector<1x8x1xf32> -> vector<1x8x1xf32>
    %23 = vector.broadcast %22 : vector<1x8x1xf32> to vector<1x8x8xf32>
    %24 = arith.mulf %19, %23 : vector<1x8x8xf32>
    %25 = arith.truncf %24 : vector<1x8x8xf32> to vector<1x8x8xbf16>
    "tpu.trace_start"() <{level = 10 : i32, message = "bnm,bmd->bnd"}> : () -> ()
    %cst_9 = arith.constant dense<0.000000e+00> : vector<1x8x8xf32>
    %26 = tpu.matmul %25, %13, %cst_9 {dimension_numbers = #tpu.dot_dimension_numbers<[2], [1], [1], [2], [0, 0, 0, 1, 1, 2], [0], [0]>} : vector<1x8x8xbf16>, vector<1x8x8xbf16>, vector<1x8x8xf32> -> vector<1x8x8xf32>
    "tpu.trace_stop"() : () -> ()
    %27 = vector.shape_cast %26 : vector<1x8x8xf32> to vector<8x8xf32>
    %28 = arith.truncf %27 : vector<8x8xf32> to vector<8x8xbf16>
    %29 = vector.extract_strided_slice %7 {offsets = [0, 8], sizes = [8, 8], strides = [1, 1]} : vector<8x96xbf16> to vector<8x8xbf16>
    %30 = vector.shape_cast %29 : vector<8x8xbf16> to vector<1x8x8xbf16>
    %31 = vector.extract_strided_slice %7 {offsets = [0, 40], sizes = [8, 8], strides = [1, 1]} : vector<8x96xbf16> to vector<8x8xbf16>
    %32 = vector.shape_cast %31 : vector<8x8xbf16> to vector<1x8x8xbf16>
    %33 = vector.extract_strided_slice %7 {offsets = [0, 72], sizes = [8, 8], strides = [1, 1]} : vector<8x96xbf16> to vector<8x8xbf16>
    %34 = vector.shape_cast %33 : vector<8x8xbf16> to vector<1x8x8xbf16>
    "tpu.trace_start"() <{level = 10 : i32, message = "bnd,bmd->bnm"}> : () -> ()
    %cst_10 = arith.constant dense<0.000000e+00> : vector<1x8x8xf32>
    %35 = tpu.matmul %30, %32, %cst_10 {dimension_numbers = #tpu.dot_dimension_numbers<[2], [2], [1], [1], [0, 0, 0, 1, 1, 1], [0], [0]>} : vector<1x8x8xbf16>, vector<1x8x8xbf16>, vector<1x8x8xf32> -> vector<1x8x8xf32>
    "tpu.trace_stop"() : () -> ()
    %cst_11 = arith.constant dense<0xFF800000> : vector<1x8xf32>
    %36 = vector.multi_reduction <maximumf>, %35, %cst_11 [2] : vector<1x8x8xf32> to vector<1x8xf32>
    %37 = vector.shape_cast %36 : vector<1x8xf32> to vector<1x8x1xf32>
    %38 = vector.broadcast %37 : vector<1x8x1xf32> to vector<1x8x8xf32>
    %39 = arith.subf %35, %38 : vector<1x8x8xf32>
    %40 = math.exp %39 : vector<1x8x8xf32>
    %cst_12 = arith.constant dense<0.000000e+00> : vector<1x8xf32>
    %41 = vector.multi_reduction <add>, %40, %cst_12 [2] : vector<1x8x8xf32> to vector<1x8xf32>
    %42 = vector.shape_cast %41 : vector<1x8xf32> to vector<1x8x1xf32>
    %43 = tpu.reciprocal %42 {approx = true} : vector<1x8x1xf32> -> vector<1x8x1xf32>
    %44 = vector.broadcast %43 : vector<1x8x1xf32> to vector<1x8x8xf32>
    %45 = arith.mulf %40, %44 : vector<1x8x8xf32>
    %46 = arith.truncf %45 : vector<1x8x8xf32> to vector<1x8x8xbf16>
    "tpu.trace_start"() <{level = 10 : i32, message = "bnm,bmd->bnd"}> : () -> ()
    %cst_13 = arith.constant dense<0.000000e+00> : vector<1x8x8xf32>
    %47 = tpu.matmul %46, %34, %cst_13 {dimension_numbers = #tpu.dot_dimension_numbers<[2], [1], [1], [2], [0, 0, 0, 1, 1, 2], [0], [0]>} : vector<1x8x8xbf16>, vector<1x8x8xbf16>, vector<1x8x8xf32> -> vector<1x8x8xf32>
    "tpu.trace_stop"() : () -> ()
    %48 = vector.shape_cast %47 : vector<1x8x8xf32> to vector<8x8xf32>
    %49 = arith.truncf %48 : vector<8x8xf32> to vector<8x8xbf16>
    %50 = vector.extract_strided_slice %7 {offsets = [0, 16], sizes = [8, 8], strides = [1, 1]} : vector<8x96xbf16> to vector<8x8xbf16>
    %51 = vector.shape_cast %50 : vector<8x8xbf16> to vector<1x8x8xbf16>
    %52 = vector.extract_strided_slice %7 {offsets = [0, 48], sizes = [8, 8], strides = [1, 1]} : vector<8x96xbf16> to vector<8x8xbf16>
    %53 = vector.shape_cast %52 : vector<8x8xbf16> to vector<1x8x8xbf16>
    %54 = vector.extract_strided_slice %7 {offsets = [0, 80], sizes = [8, 8], strides = [1, 1]} : vector<8x96xbf16> to vector<8x8xbf16>
    %55 = vector.shape_cast %54 : vector<8x8xbf16> to vector<1x8x8xbf16>
    "tpu.trace_start"() <{level = 10 : i32, message = "bnd,bmd->bnm"}> : () -> ()
    %cst_14 = arith.constant dense<0.000000e+00> : vector<1x8x8xf32>
    %56 = tpu.matmul %51, %53, %cst_14 {dimension_numbers = #tpu.dot_dimension_numbers<[2], [2], [1], [1], [0, 0, 0, 1, 1, 1], [0], [0]>} : vector<1x8x8xbf16>, vector<1x8x8xbf16>, vector<1x8x8xf32> -> vector<1x8x8xf32>
    "tpu.trace_stop"() : () -> ()
    %cst_15 = arith.constant dense<0xFF800000> : vector<1x8xf32>
    %57 = vector.multi_reduction <maximumf>, %56, %cst_15 [2] : vector<1x8x8xf32> to vector<1x8xf32>
    %58 = vector.shape_cast %57 : vector<1x8xf32> to vector<1x8x1xf32>
    %59 = vector.broadcast %58 : vector<1x8x1xf32> to vector<1x8x8xf32>
    %60 = arith.subf %56, %59 : vector<1x8x8xf32>
    %61 = math.exp %60 : vector<1x8x8xf32>
    %cst_16 = arith.constant dense<0.000000e+00> : vector<1x8xf32>
    %62 = vector.multi_reduction <add>, %61, %cst_16 [2] : vector<1x8x8xf32> to vector<1x8xf32>
    %63 = vector.shape_cast %62 : vector<1x8xf32> to vector<1x8x1xf32>
    %64 = tpu.reciprocal %63 {approx = true} : vector<1x8x1xf32> -> vector<1x8x1xf32>
    %65 = vector.broadcast %64 : vector<1x8x1xf32> to vector<1x8x8xf32>
    %66 = arith.mulf %61, %65 : vector<1x8x8xf32>
    %67 = arith.truncf %66 : vector<1x8x8xf32> to vector<1x8x8xbf16>
    "tpu.trace_start"() <{level = 10 : i32, message = "bnm,bmd->bnd"}> : () -> ()
    %cst_17 = arith.constant dense<0.000000e+00> : vector<1x8x8xf32>
    %68 = tpu.matmul %67, %55, %cst_17 {dimension_numbers = #tpu.dot_dimension_numbers<[2], [1], [1], [2], [0, 0, 0, 1, 1, 2], [0], [0]>} : vector<1x8x8xbf16>, vector<1x8x8xbf16>, vector<1x8x8xf32> -> vector<1x8x8xf32>
    "tpu.trace_stop"() : () -> ()
    %69 = vector.shape_cast %68 : vector<1x8x8xf32> to vector<8x8xf32>
    %70 = arith.truncf %69 : vector<8x8xf32> to vector<8x8xbf16>
    %71 = vector.extract_strided_slice %7 {offsets = [0, 24], sizes = [8, 8], strides = [1, 1]} : vector<8x96xbf16> to vector<8x8xbf16>
    %72 = vector.shape_cast %71 : vector<8x8xbf16> to vector<1x8x8xbf16>
    %73 = vector.extract_strided_slice %7 {offsets = [0, 56], sizes = [8, 8], strides = [1, 1]} : vector<8x96xbf16> to vector<8x8xbf16>
    %74 = vector.shape_cast %73 : vector<8x8xbf16> to vector<1x8x8xbf16>
    %75 = vector.extract_strided_slice %7 {offsets = [0, 88], sizes = [8, 8], strides = [1, 1]} : vector<8x96xbf16> to vector<8x8xbf16>
    %76 = vector.shape_cast %75 : vector<8x8xbf16> to vector<1x8x8xbf16>
    "tpu.trace_start"() <{level = 10 : i32, message = "bnd,bmd->bnm"}> : () -> ()
    %cst_18 = arith.constant dense<0.000000e+00> : vector<1x8x8xf32>
    %77 = tpu.matmul %72, %74, %cst_18 {dimension_numbers = #tpu.dot_dimension_numbers<[2], [2], [1], [1], [0, 0, 0, 1, 1, 1], [0], [0]>} : vector<1x8x8xbf16>, vector<1x8x8xbf16>, vector<1x8x8xf32> -> vector<1x8x8xf32>
    "tpu.trace_stop"() : () -> ()
    %cst_19 = arith.constant dense<0xFF800000> : vector<1x8xf32>
    %78 = vector.multi_reduction <maximumf>, %77, %cst_19 [2] : vector<1x8x8xf32> to vector<1x8xf32>
    %79 = vector.shape_cast %78 : vector<1x8xf32> to vector<1x8x1xf32>
    %80 = vector.broadcast %79 : vector<1x8x1xf32> to vector<1x8x8xf32>
    %81 = arith.subf %77, %80 : vector<1x8x8xf32>
    %82 = math.exp %81 : vector<1x8x8xf32>
    %cst_20 = arith.constant dense<0.000000e+00> : vector<1x8xf32>
    %83 = vector.multi_reduction <add>, %82, %cst_20 [2] : vector<1x8x8xf32> to vector<1x8xf32>
    %84 = vector.shape_cast %83 : vector<1x8xf32> to vector<1x8x1xf32>
    %85 = tpu.reciprocal %84 {approx = true} : vector<1x8x1xf32> -> vector<1x8x1xf32>
    %86 = vector.broadcast %85 : vector<1x8x1xf32> to vector<1x8x8xf32>
    %87 = arith.mulf %82, %86 : vector<1x8x8xf32>
    %88 = arith.truncf %87 : vector<1x8x8xf32> to vector<1x8x8xbf16>
    "tpu.trace_start"() <{level = 10 : i32, message = "bnm,bmd->bnd"}> : () -> ()
    %cst_21 = arith.constant dense<0.000000e+00> : vector<1x8x8xf32>
    %89 = tpu.matmul %88, %76, %cst_21 {dimension_numbers = #tpu.dot_dimension_numbers<[2], [1], [1], [2], [0, 0, 0, 1, 1, 2], [0], [0]>} : vector<1x8x8xbf16>, vector<1x8x8xbf16>, vector<1x8x8xf32> -> vector<1x8x8xf32>
    "tpu.trace_stop"() : () -> ()
    %90 = vector.shape_cast %89 : vector<1x8x8xf32> to vector<8x8xf32>
    %91 = arith.truncf %90 : vector<8x8xf32> to vector<8x8xbf16>
    %92 = tpu.concatenate %28, %49, %70, %91 in 1 : vector<8x8xbf16>, vector<8x8xbf16>, vector<8x8xbf16>, vector<8x8xbf16> -> vector<8x32xbf16>
    %c0_22 = arith.constant 0 : index
    %c0_23 = arith.constant 0 : index
    %93 = vector.load %arg4[%c0_22, %c0_23] : memref<32x32xbf16, #tpu.memory_space<vmem>>, vector<32x32xbf16>
    %cst_24 = arith.constant dense<0.000000e+00> : vector<8x32xf32>
    %94 = tpu.matmul %92, %93, %cst_24 {dimension_numbers = #tpu.dot_dimension_numbers<[1], [0], [0], [1], [0, 0, 1, 1], [], []>} : vector<8x32xbf16>, vector<32x32xbf16>, vector<8x32xf32> -> vector<8x32xf32>
    %c0_25 = arith.constant 0 : index
    %c0_26 = arith.constant 0 : index
    %95 = vector.load %arg5[%c0_25, %c0_26] : memref<1x32xf32, #tpu.memory_space<vmem>>, vector<1x32xf32>
    %96 = vector.broadcast %95 : vector<1x32xf32> to vector<8x32xf32>
    %97 = arith.addf %94, %96 : vector<8x32xf32>
    %98 = vector.shape_cast %97 : vector<8x32xf32> to vector<1x8x32xf32>
    %c0_27 = arith.constant 0 : index
    %c0_28 = arith.constant 0 : index
    %c0_29 = arith.constant 0 : index
    %99 = vector.load %arg6[%c0_27, %c0_28, %c0_29] : memref<1x8x32xf32, #tpu.memory_space<vmem>>, vector<1x8x32xf32>
    tpu.vector_store %arg6[%c0_27, %c0_28, %c0_29], %98 {strides = array<i32>} : memref<1x8x32xf32, #tpu.memory_space<vmem>>, vector<1x8x32xf32>,
    return
  }
  func.func @transform_0(%arg0: i32) -> (i32, i32, i32) {
    %c0_i32 = arith.constant 0 : i32
    %c0_i32_0 = arith.constant 0 : i32
    %c0_i32_1 = arith.constant 0 : i32
    return %arg0, %c0_i32, %c0_i32_0 : i32, i32, i32
  }
  func.func @transform_1(%arg0: i32) -> (i32, i32) {
    %c0_i32 = arith.constant 0 : i32
    %c0_i32_0 = arith.constant 0 : i32
    %c0_i32_1 = arith.constant 0 : i32
    return %c0_i32, %c0_i32_0 : i32, i32
  }
  func.func @transform_2(%arg0: i32) -> (i32, i32) {
    %c0_i32 = arith.constant 0 : i32
    %c0_i32_0 = arith.constant 0 : i32
    %c0_i32_1 = arith.constant 0 : i32
    return %c0_i32, %c0_i32_0 : i32, i32
  }
  func.func @transform_3(%arg0: i32) -> (i32, i32) {
    %c0_i32 = arith.constant 0 : i32
    %c0_i32_0 = arith.constant 0 : i32
    %c0_i32_1 = arith.constant 0 : i32
    return %c0_i32, %c0_i32_0 : i32, i32
  }
  func.func @transform_4(%arg0: i32) -> (i32, i32) {
    %c0_i32 = arith.constant 0 : i32
    %c0_i32_0 = arith.constant 0 : i32
    %c0_i32_1 = arith.constant 0 : i32
    return %c0_i32, %c0_i32_0 : i32, i32
  }
  func.func @transform_5(%arg0: i32) -> (i32, i32, i32) {
    %c0_i32 = arith.constant 0 : i32
    %c0_i32_0 = arith.constant 0 : i32
    %c0_i32_1 = arith.constant 0 : i32
    return %arg0, %c0_i32, %c0_i32_0 : i32, i32, i32
  }
}

</mosaic_0001>

<llo_original>
// kernel: tpu_custom_call.1
$region0: #{tpu_custom_call.1}
  #allocation0 [shape = 'u32[]', space=smem, size = 0x4, offset = 0x4, fixed_abs, tag = 'smem constant byte address 0x4 - core index']
  #allocation1 [shape = 'u32[144,128]{1,0:T(1,128)}', space=vmem, size = 0x12000, scoped, tag = 'internal scratch']
  %s0 = inlined_call_operand.hbm [shape: bf16[2,8,32], index: 0, kind: input, shape index: {}]
  %s1 = inlined_call_operand.hbm [shape: bf16[32,96], index: 1, kind: input, shape index: {}]
  %s2 = inlined_call_operand.vmem [shape: f32[1,96], index: 2, kind: input, shape index: {}]
  %s3 = inlined_call_operand.hbm [shape: bf16[32,32], index: 3, kind: input, shape index: {}]
  %s4 = inlined_call_operand.vmem [shape: f32[1,32], index: 4, kind: input, shape index: {}]
  %s5 = inlined_call_operand.hbm [shape: f32[2,8,32], index: 5, kind: output, shape index: {}]
  %s6 = sld [smem:[#allocation0]]
  $region65: #{tpu_custom_call.1} parent=0
    _
  %s8 = ssub.s32 1, %s6
  %s9 = scalar_select 0, %s8, %s6
  $region1: #{tpu_custom_call.1} parent=0
    #allocation2 [shape = 'u8[4096]{0}', space=vmem, size = 0x1000, scoped, tag = 'input window, operand 0']
    #allocation3 [shape = 's32[2]{0}', space=sflag, size = 0x8, scoped, tag = 'scoped memory for tpu_custom_call.1']
    #allocation4 [shape = 's32[2]{0}', space=sflag, size = 0x8, scoped, tag = 'scoped memory for tpu_custom_call.1']
    #allocation5 [shape = 'u8[8192]{0}', space=vmem, size = 0x2000, scoped, tag = 'input window, operand 1, single buffered']
    #allocation6 [shape = 's32[1]{0}', space=sflag, size = 0x4, scoped, tag = 'scoped memory for tpu_custom_call.1']
    #allocation7 [shape = 'u8[8192]{0}', space=vmem, size = 0x2000, scoped, tag = 'input window, operand 3, single buffered']
    #allocation8 [shape = 'u8[8192]{0}', space=vmem, size = 0x2000, scoped, tag = 'output window, operand 0']
    %10 = vsyncpa [#allocation3], 0
    %s11 = scalar_lea.sflag [#allocation3], 1
    %12 = vsyncpa %s11, 0
    %13 = vsyncpa [#allocation6], 0
    %14 = vsyncpa [#allocation4], 0
    %s15 = scalar_lea.sflag [#allocation4], 1
    %16 = vsyncpa %s15, 0
    loop: start=0, step=1, limit=4
    $region2: #{tpu_custom_call.1} parent=1 // loop_pre_header
      _
    $region3: #{tpu_custom_call.1} parent=1 // loop_header
      %s18 = sphi 0, %s22
      %p19 = scmp.ge.s32.totalorder %s18, 4
      %s28 = sphi 0, %s30
      %s31 = sphi 0, %s28
      %s32 = sphi 0, %s31
      %s48 = sphi 0, %s32
      %s52 = sphi 0, %s52
      %s54 = sphi 0, %s52
      %s55 = sphi 0, %s54
      %s69 = sphi 0, %s55
      %s73 = sphi 0, %s73
      %s75 = sphi 0, %s73
      %s76 = sphi 0, %s75
      %s90 = sphi 0, %s76
      %s94 = sphi 0, %s94
      %s96 = sphi 0, %s94
      %s97 = sphi 0, %s96
      %s111 = sphi 0, %s97
      %s115 = sphi 0, %s115
      %s117 = sphi 0, %s115
      %s118 = sphi 0, %s117
      %s132 = sphi 0, %s118
      %s138 = sphi 0, %s140
      %s141 = sphi 0, %s138
      %s142 = sphi 0, %s141
      %s158 = sphi 0, %s142
    $region4: #{tpu_custom_call.1} parent=1 // loop_header_branch
      %21 = sbr.rel (%p19) target = $region8
    $region5: #{tpu_custom_call.1} parent=1 // loop_body
      %s23 = ssub.s32 %s18, 1
      %s24 = ssub.s32 %s18, 2
      %s25 = sadd.s32 %s18, 1
      %s26 = ssub.s32 %s18, %s25
      %p27 = scmp.eq.s32.totalorder %s26, 0
      %s29 = sadd.s32 %s28, 1
      %s30 = scalar_select %p27, %s28, %s29
      %p33 = pneg %p27
      %p34 = scmp.eq.s32.totalorder %s18, 1
      %p35 = por %p33, %p34
      %p36 = scmp.ne.s32.totalorder %s28, %s31
      %p37 = scmp.eq.s32.totalorder %s18, 0
      %p38 = por %p36, %p37
      %p39 = scmp.ne.s32.totalorder %s28, %s31
      %p40 = scmp.eq.s32.totalorder %s23, 1
      %p41 = por %p39, %p40
      %p42 = scmp.ne.s32.totalorder %s31, %s32
      %p43 = scmp.eq.s32.totalorder %s23, 0
      %p44 = por %p42, %p43
      %p45 = scmp.ne.s32.totalorder %s31, %s32
      %p46 = scmp.eq.s32.totalorder %s24, 1
      %p47 = por %p45, %p46
      %p49 = scmp.ne.s32.totalorder %s32, %s48
      %p50 = scmp.eq.s32.totalorder %s24, 0
      %p51 = por %p49, %p50
      %s53 = sadd.s32 %s52, 1
      %p56 = scmp.eq.s32.totalorder %s18, 1
      %p57 = scmp.ne.s32.totalorder %s52, %s54
      %p58 = scmp.eq.s32.totalorder %s18, 0
      %p59 = por %p57, %p58
      %p60 = scmp.ne.s32.totalorder %s52, %s54
      %p61 = scmp.eq.s32.totalorder %s23, 1
      %p62 = por %p60, %p61
      %p63 = scmp.ne.s32.totalorder %s54, %s55
      %p64 = scmp.eq.s32.totalorder %s23, 0
      %p65 = por %p63, %p64
      %p66 = scmp.ne.s32.totalorder %s54, %s55
      %p67 = scmp.eq.s32.totalorder %s24, 1
      %p68 = por %p66, %p67
      %p70 = scmp.ne.s32.totalorder %s55, %s69
      %p71 = scmp.eq.s32.totalorder %s24, 0
      %p72 = por %p70, %p71
      %s74 = sadd.s32 %s73, 1
      %p77 = scmp.eq.s32.totalorder %s18, 1
      %p78 = scmp.ne.s32.totalorder %s73, %s75
      %p79 = scmp.eq.s32.totalorder %s18, 0
      %p80 = por %p78, %p79
      %p81 = scmp.ne.s32.totalorder %s73, %s75
      %p82 = scmp.eq.s32.totalorder %s23, 1
      %p83 = por %p81, %p82
      %p84 = scmp.ne.s32.totalorder %s75, %s76
      %p85 = scmp.eq.s32.totalorder %s23, 0
      %p86 = por %p84, %p85
      %p87 = scmp.ne.s32.totalorder %s75, %s76
      %p88 = scmp.eq.s32.totalorder %s24, 1
      %p89 = por %p87, %p88
      %p91 = scmp.ne.s32.totalorder %s76, %s90
      %p92 = scmp.eq.s32.totalorder %s24, 0
      %p93 = por %p91, %p92
      %s95 = sadd.s32 %s94, 1
      %p98 = scmp.eq.s32.totalorder %s18, 1
      %p99 = scmp.ne.s32.totalorder %s94, %s96
      %p100 = scmp.eq.s32.totalorder %s18, 0
      %p101 = por %p99, %p100
      %p102 = scmp.ne.s32.totalorder %s94, %s96
      %p103 = scmp.eq.s32.totalorder %s23, 1
      %p104 = por %p102, %p103
      %p105 = scmp.ne.s32.totalorder %s96, %s97
      %p106 = scmp.eq.s32.totalorder %s23, 0
      %p107 = por %p105, %p106
      %p108 = scmp.ne.s32.totalorder %s96, %s97
      %p109 = scmp.eq.s32.totalorder %s24, 1
      %p110 = por %p108, %p109
      %p112 = scmp.ne.s32.totalorder %s97, %s111
      %p113 = scmp.eq.s32.totalorder %s24, 0
      %p114 = por %p112, %p113
      %s116 = sadd.s32 %s115, 1
      %p119 = scmp.eq.s32.totalorder %s18, 1
      %p120 = scmp.ne.s32.totalorder %s115, %s117
      %p121 = scmp.eq.s32.totalorder %s18, 0
      %p122 = por %p120, %p121
      %p123 = scmp.ne.s32.totalorder %s115, %s117
      %p124 = scmp.eq.s32.totalorder %s23, 1
      %p125 = por %p123, %p124
      %p126 = scmp.ne.s32.totalorder %s117, %s118
      %p127 = scmp.eq.s32.totalorder %s23, 0
      %p128 = por %p126, %p127
      %p129 = scmp.ne.s32.totalorder %s117, %s118
      %p130 = scmp.eq.s32.totalorder %s24, 1
      %p131 = por %p129, %p130
      %p133 = scmp.ne.s32.totalorder %s118, %s132
      %p134 = scmp.eq.s32.totalorder %s24, 0
      %p135 = por %p133, %p134
      %s136 = ssub.s32 %s18, %s25
      %p137 = scmp.eq.s32.totalorder %s136, 0
      %s139 = sadd.s32 %s138, 1
      %s140 = scalar_select %p137, %s138, %s139
      %p143 = pneg %p137
      %p144 = scmp.eq.s32.totalorder %s18, 1
      %p145 = por %p143, %p144
      %p146 = scmp.ne.s32.totalorder %s138, %s141
      %p147 = scmp.eq.s32.totalorder %s18, 0
      %p148 = por %p146, %p147
      %p149 = scmp.ne.s32.totalorder %s138, %s141
      %p150 = scmp.eq.s32.totalorder %s23, 1
      %p151 = por %p149, %p150
      %p152 = scmp.ne.s32.totalorder %s141, %s142
      %p153 = scmp.eq.s32.totalorder %s23, 0
      %p154 = por %p152, %p153
      %p155 = scmp.ne.s32.totalorder %s141, %s142
      %p156 = scmp.eq.s32.totalorder %s24, 1
      %p157 = por %p155, %p156
      %p159 = scmp.ne.s32.totalorder %s142, %s158
      %p160 = scmp.eq.s32.totalorder %s24, 0
      %p161 = por %p159, %p160
      %p162 = scmp.le.s32.totalorder 1, %s18
      %p163 = scmp.lt.s32.totalorder %s18, 3
      %p164 = pnand %p162, %p163
      %p165 = pneg %p164
      // Predicated region
      $region9: #{tpu_custom_call.1} parent=5 // pred_check
        _
      $region10: #{tpu_custom_call.1} parent=5 // pred_check_branch
        %167 = sbr.rel (%p164) target = $region12
      $region11: #{tpu_custom_call.1} parent=5 // pred_region
        %s168 = ssub.s32 %s18, 1
        // Predicated region
        $region13: #{tpu_custom_call.1} parent=11 // pred_check
          %p169 = pneg %p65
        $region14: #{tpu_custom_call.1} parent=11 // pred_check_branch
          %171 = sbr.rel (%p169) target = $region16
        $region15: #{tpu_custom_call.1} parent=11 // pred_region
          %s173 = ssub.s32 256, 256
          %174 = vsyncadd [#allocation6], %s173
          %s175 = sshll.u32 [#allocation5], 4
          %s176 = int_to_ptr.vmem [resolvable:$true] %s175
          %181 = dma.hbm_to_vmem [thread:$0]  %s1, 256, %s176, [#allocation6], 64, 64, 4
        $region16: #{tpu_custom_call.1} parent=11 // pred_fallthru
          _
        // Predicated region
        $region17: #{tpu_custom_call.1} parent=11 // pred_check
          %p182 = pneg %p86
        $region18: #{tpu_custom_call.1} parent=11 // pred_check_branch
          %184 = sbr.rel (%p182) target = $region20
        $region19: #{tpu_custom_call.1} parent=11 // pred_region
          _
        $region20: #{tpu_custom_call.1} parent=11 // pred_fallthru
          _
        // Predicated region
        $region21: #{tpu_custom_call.1} parent=11 // pred_check
          %p185 = pneg %p107
        $region22: #{tpu_custom_call.1} parent=11 // pred_check_branch
          %187 = sbr.rel (%p185) target = $region24
        $region23: #{tpu_custom_call.1} parent=11 // pred_region
          %s189 = ssub.s32 256, 256
          %190 = vsyncadd [#allocation6], %s189
          %s191 = sshll.u32 [#allocation7], 4
          %s192 = int_to_ptr.vmem [resolvable:$true] %s191
          %197 = dma.hbm_to_vmem [thread:$0]  %s3, 256, %s192, [#allocation6], 64, 64, 4
        $region24: #{tpu_custom_call.1} parent=11 // pred_fallthru
          _
        // Predicated region
        $region25: #{tpu_custom_call.1} parent=11 // pred_check
          %p198 = pneg %p128
        $region26: #{tpu_custom_call.1} parent=11 // pred_check_branch
          %200 = sbr.rel (%p198) target = $region28
        $region27: #{tpu_custom_call.1} parent=11 // pred_region
          _
        $region28: #{tpu_custom_call.1} parent=11 // pred_fallthru
          _
      $region12: #{tpu_custom_call.1} parent=5 // pred_fallthru
        _
      %p201 = scmp.lt.s32.totalorder %s18, 2
      // Predicated region
      $region29: #{tpu_custom_call.1} parent=5 // pred_check
        %p202 = pneg %p201
      $region30: #{tpu_custom_call.1} parent=5 // pred_check_branch
        %204 = sbr.rel (%p202) target = $region32
      $region31: #{tpu_custom_call.1} parent=5 // pred_region
        // Predicated region
        $region33: #{tpu_custom_call.1} parent=31 // pred_check
          %p205 = pneg %p38
        $region34: #{tpu_custom_call.1} parent=31 // pred_check_branch
          %207 = sbr.rel (%p205) target = $region36
        $region35: #{tpu_custom_call.1} parent=31 // pred_region
          %s208 = sand.u32 %s28, 1
          %s209 = scalar_lea.sflag [#allocation3], %s208
          %s210 = sand.u32 %s28, 1
          %s211 = smul.addr %s210, 4
          %s212 = scalar_lea.vmem [#allocation2], %s211
          %s214 = ssub.s32 64, 64
          %215 = vsyncadd %s209, %s214
          %s216 = smul.addr %s18, 64
          %s217 = scalar_lea.hbm %s0, %s216
          %s219 = sshll.u32 %s212, 4
          %s220 = int_to_ptr.vmem [resolvable:$true] %s219
          %222 = dma.hbm_to_vmem [thread:$0]  %s217, 64, %s220, %s209
        $region36: #{tpu_custom_call.1} parent=31 // pred_fallthru
          _
      $region32: #{tpu_custom_call.1} parent=5 // pred_fallthru
        _
      %p223 = scmp.le.s32.totalorder 1, %s18
      %p224 = scmp.lt.s32.totalorder %s18, 3
      %p225 = pnand %p223, %p224
      %p226 = pneg %p225
      // Predicated region
      $region37: #{tpu_custom_call.1} parent=5 // pred_check
        _
      $region38: #{tpu_custom_call.1} parent=5 // pred_check_branch
        %228 = sbr.rel (%p225) target = $region40
      $region39: #{tpu_custom_call.1} parent=5 // pred_region
        %s229 = ssub.s32 %s18, 1
        %s230 = sand.u32 %s31, 1
        %s231 = scalar_lea.sflag [#allocation3], %s230
        %s232 = sand.u32 %s31, 1
        %s233 = smul.addr %s232, 4
        %s234 = scalar_lea.vmem [#allocation2], %s233
        // Predicated region
        $region41: #{tpu_custom_call.1} parent=39 // pred_check
          %p235 = pneg %p44
        $region42: #{tpu_custom_call.1} parent=39 // pred_check_branch
          %237 = sbr.rel (%p235) target = $region44
        $region43: #{tpu_custom_call.1} parent=39 // pred_region
          %238 = dma.done %s231, 64
        $region44: #{tpu_custom_call.1} parent=39 // pred_fallthru
          _
        // Predicated region
        $region45: #{tpu_custom_call.1} parent=39 // pred_check
          %p239 = pneg %p65
        $region46: #{tpu_custom_call.1} parent=39 // pred_check_branch
          %241 = sbr.rel (%p239) target = $region48
        $region47: #{tpu_custom_call.1} parent=39 // pred_region
          %242 = dma.done [#allocation6], 256
        $region48: #{tpu_custom_call.1} parent=39 // pred_fallthru
          _
        // Predicated region
        $region49: #{tpu_custom_call.1} parent=39 // pred_check
          %p243 = pneg %p107
        $region50: #{tpu_custom_call.1} parent=39 // pred_check_branch
          %245 = sbr.rel (%p243) target = $region52
        $region51: #{tpu_custom_call.1} parent=39 // pred_region
          %246 = dma.done [#allocation6], 256
        $region52: #{tpu_custom_call.1} parent=39 // pred_fallthru
          _
        %s247 = sand.u32 %s31, 1
        %s248 = scalar_lea.sflag [#allocation3], %s247
        %s249 = sand.u32 %s31, 1
        %s250 = smul.addr %s249, 4
        %s251 = scalar_lea.vmem [#allocation2], %s250
        %p252 = pneg %p44
        %p253 = pneg %p41
        %p254 = pneg %p65
        %p255 = pneg %p62
        %p256 = pneg %p86
        %p257 = pneg %p83
        %p258 = pneg %p107
        %p259 = pneg %p104
        %p260 = pneg %p128
        %p261 = pneg %p125
        %p262 = pneg %p154
        %p263 = pneg %p151
        %s264 = sand.u32 %s141, 1
        %s265 = scalar_lea.sflag [#allocation4], %s264
        %s266 = sand.u32 %s141, 1
        %s267 = smul.addr %s266, 8
        %s268 = scalar_lea.vmem [#allocation8], %s267
        %v270 = vld [vmem:[%s234] sm:$0xf]
        %v271 = vld [vmem:[#allocation5] sm:$0xf]
        %v272 = vld [vmem:[#allocation5 + $0x4] sm:$0xf]
        %v273 = vld [vmem:[#allocation5 + $0x8] sm:$0xf]
        %v274 = vld [vmem:[#allocation5 + $0xc] sm:$0xf]
        %v275 = vld [vmem:[%s2] sm:$0x1]
        %v277 = vlaneseq
        %v278 = vshrl.u32 %v277, 7
        %v279 = vsub.s32 0, %v278
        %v280 = vrot.slane %v275, %v279
        %v286 = vunpack.c.l.b16 %v271
        %v287 = vunpack.c.l.b16 %v272
        %v288 = vunpack.c.l.b16 %v273
        %v289 = vunpack.c.l.b16 %v274
        %v290 = vpack.c.b16 %v287, %v286
        %v291 = vpack.c.b16 %v289, %v288
        %vm294 = vcmask 261120
        %v296 = vsel %vm294, %v270, 0
        %298 = vmatprep.subr.bf16.mxu0 0
        %299 = vmatpush1.bf16.msra.mxu0 0
        %300 = vmatprep.subr.bf16.mxu0 0
        %301 = vmatpush1.bf16.msra.mxu0 0
        %302 = vmatprep.subr.bf16.mxu0 0
        %303 = vmatpush1.bf16.msra.mxu0 0
        %304 = vmatprep.subr.bf16.mxu0 0
        %305 = vmatpush1.bf16.msra.mxu0 0
        %306 = vmatprep.subr.bf16.mxu0 0
        %307 = vmatpush1.bf16.msra.mxu0 0
        %308 = vmatprep.subr.bf16.mxu0 0
        %309 = vmatpush1.bf16.msra.mxu0 0
        %310 = vmatprep.subr.bf16.mxu0 0
        %311 = vmatpush1.bf16.msra.mxu0 %v291
        %312 = vmatprep.subr.bf16.mxu0 0
        %313 = vmatpush1.bf16.msra.mxu0 %v290
        %314 = vmatprep.subr.bf16.mxu0 0
        %315 = vmatpush2.bf16.msra.mxu0 0
        %316 = vmatprep.subr.bf16.mxu0 0
        %317 = vmatpush2.bf16.msra.mxu0 0
        %318 = vmatprep.subr.bf16.mxu0 0
        %319 = vmatpush2.bf16.msra.mxu0 0
        %320 = vmatprep.subr.bf16.mxu0 0
        %321 = vmatpush2.bf16.msra.mxu0 0
        %322 = vmatprep.subr.bf16.mxu0 0
        %323 = vmatpush2.bf16.msra.mxu0 0
        %324 = vmatprep.subr.bf16.mxu0 0
        %325 = vmatpush2.bf16.msra.mxu0 0
        %326 = vmatprep.subr.bf16.mxu0 0
        %327 = vmatpush2.bf16.msra.mxu0 0
        %328 = vmatprep.subr.bf16.mxu0 0
        %329 = vmatpush2.bf16.msra.mxu0 0
        %330 = vmatprep.mubr.bf16.mxu0 0
        %331 = vmatmul.mubr.bf16.gmra.mxu0 %v296
        %v332 = vpop.f32.mrf.mxu0
        %v333 = vadd.f32 %v280, %v332
        %v334 = vpop.f32.mrf.mxu0
        %v335 = vpop.f32.mrf.mxu0
        %v336 = vpop.f32.mrf.mxu0
        %337 = vdwg.mxu0
        %v338 = vpack.c.bf16 %v333, %v333
        %340 = vrot.lane.b32.xlu0 %v338, 96
        %v341 = vpop.permute.xlu0 %340
        %vm342 = vcmask 64512
        %v344 = vsel %vm342, %v338, 0
        %v347 = vsel %vm342, %v341, 0
        %349 = vmatprep.subr.bf16.mxu0 0
        %350 = vmatpush1.bf16.xpose.msra.mxu0 0
        %351 = vmatprep.subr.bf16.mxu0 0
        %352 = vmatpush1.bf16.xpose.msra.mxu0 0
        %353 = vmatprep.subr.bf16.mxu0 0
        %354 = vmatpush1.bf16.xpose.msra.mxu0 0
        %355 = vmatprep.subr.bf16.mxu0 0
        %356 = vmatpush1.bf16.xpose.msra.mxu0 0
        %357 = vmatprep.subr.bf16.mxu0 0
        %358 = vmatpush1.bf16.xpose.msra.mxu0 0
        %359 = vmatprep.subr.bf16.mxu0 0
        %360 = vmatpush1.bf16.xpose.msra.mxu0 0
        %361 = vmatprep.subr.bf16.mxu0 0
        %362 = vmatpush1.bf16.xpose.msra.mxu0 0
        %363 = vmatprep.subr.bf16.mxu0 0
        %364 = vmatpush1.bf16.xpose.msra.mxu0 %v347
        %365 = vmatprep.subr.bf16.mxu0 0
        %366 = vmatpush2.bf16.xpose.msra.mxu0 0
        %367 = vmatprep.subr.bf16.mxu0 0
        %368 = vmatpush2.bf16.xpose.msra.mxu0 0
        %369 = vmatprep.subr.bf16.mxu0 0
        %370 = vmatpush2.bf16.xpose.msra.mxu0 0
        %371 = vmatprep.subr.bf16.mxu0 0
        %372 = vmatpush2.bf16.xpose.msra.mxu0 0
        %373 = vmatprep.subr.bf16.mxu0 0
        %374 = vmatpush2.bf16.xpose.msra.mxu0 0
        %375 = vmatprep.subr.bf16.mxu0 0
        %376 = vmatpush2.bf16.xpose.msra.mxu0 0
        %377 = vmatprep.subr.bf16.mxu0 0
        %378 = vmatpush2.bf16.xpose.msra.mxu0 0
        %379 = vmatprep.subr.bf16.mxu0 0
        %380 = vmatpush2.bf16.xpose.msra.mxu0 0
        %381 = vmatprep.mubr.bf16.mxu0 0
        %382 = vmatmul.mubr.bf16.gmra.mxu0 %v344
        %v383 = vpop.f32.mrf.mxu0
        %v384 = vadd.f32 0.0, %v383
        %v385 = vpop.f32.mrf.mxu0
        %v386 = vpop.f32.mrf.mxu0
        %v387 = vpop.f32.mrf.mxu0
        %388 = vdwg.mxu0
        %v389 = vsel %vm342, %v384, -inf
        %390 = vmax.xlane.f32.xlu0 %v389
        %v391 = vpop.xlane.xlu0 %390
        %v392 = vsub.f32 %v384, %v391
        %v393 = vmul.f32 %v392, 1.442695
        %v394 = vpow.pop %v393
        %v395 = vsel %vm342, %v394, 0.0
        %396 = vadd.xlane.f32.xlu0 %v395
        %v397 = vpop.xlane.xlu0 %396
        %v398 = vrcp.pop %v397
        %v399 = vmul.f32 %v394, %v398
        %v400 = vpack.c.bf16 %v399, %v399
        %401 = vrot.lane.b32.xlu0 %v338, 64
        %v402 = vpop.permute.xlu0 %401
        %v404 = vsel %vm342, %v400, 0
        %vm406 = vcmask 1043456
        %v408 = vsel %vm406, %v402, 0
        %410 = vmatprep.subr.bf16.mxu0 0
        %411 = vmatpush1.bf16.msra.mxu0 0
        %412 = vmatprep.subr.bf16.mxu0 0
        %413 = vmatpush1.bf16.msra.mxu0 0
        %414 = vmatprep.subr.bf16.mxu0 0
        %415 = vmatpush1.bf16.msra.mxu0 0
        %416 = vmatprep.subr.bf16.mxu0 0
        %417 = vmatpush1.bf16.msra.mxu0 0
        %418 = vmatprep.subr.bf16.mxu0 0
        %419 = vmatpush1.bf16.msra.mxu0 0
        %420 = vmatprep.subr.bf16.mxu0 0
        %421 = vmatpush1.bf16.msra.mxu0 0
        %422 = vmatprep.subr.bf16.mxu0 0
        %423 = vmatpush1.bf16.msra.mxu0 0
        %424 = vmatprep.subr.bf16.mxu0 0
        %425 = vmatpush1.bf16.msra.mxu0 %v408
        %426 = vmatprep.subr.bf16.mxu0 0
        %427 = vmatpush2.bf16.msra.mxu0 0
        %428 = vmatprep.subr.bf16.mxu0 0
        %429 = vmatpush2.bf16.msra.mxu0 0
        %430 = vmatprep.subr.bf16.mxu0 0
        %431 = vmatpush2.bf16.msra.mxu0 0
        %432 = vmatprep.subr.bf16.mxu0 0
        %433 = vmatpush2.bf16.msra.mxu0 0
        %434 = vmatprep.subr.bf16.mxu0 0
        %435 = vmatpush2.bf16.msra.mxu0 0
        %436 = vmatprep.subr.bf16.mxu0 0
        %437 = vmatpush2.bf16.msra.mxu0 0
        %438 = vmatprep.subr.bf16.mxu0 0
        %439 = vmatpush2.bf16.msra.mxu0 0
        %440 = vmatprep.subr.bf16.mxu0 0
        %441 = vmatpush2.bf16.msra.mxu0 0
        %442 = vmatprep.mubr.bf16.mxu0 0
        %443 = vmatmul.mubr.bf16.gmra.mxu0 %v404
        %v444 = vpop.f32.mrf.mxu0
        %v445 = vadd.f32 0.0, %v444
        %v446 = vpop.f32.mrf.mxu0
        %v447 = vpop.f32.mrf.mxu0
        %v448 = vpop.f32.mrf.mxu0
        %449 = vdwg.mxu0
        %v450 = vpack.c.bf16 %v445, %v445
        %451 = vrot.lane.b32.xlu0 %v338, 120
        %v452 = vpop.permute.xlu0 %451
        %453 = vrot.lane.b32.xlu0 %v338, 88
        %v454 = vpop.permute.xlu0 %453
        %v456 = vsel %vm342, %v452, 0
        %v459 = vsel %vm342, %v454, 0
        %461 = vmatprep.subr.bf16.mxu0 0
        %462 = vmatpush1.bf16.xpose.msra.mxu0 0
        %463 = vmatprep.subr.bf16.mxu0 0
        %464 = vmatpush1.bf16.xpose.msra.mxu0 0
        %465 = vmatprep.subr.bf16.mxu0 0
        %466 = vmatpush1.bf16.xpose.msra.mxu0 0
        %467 = vmatprep.subr.bf16.mxu0 0
        %468 = vmatpush1.bf16.xpose.msra.mxu0 0
        %469 = vmatprep.subr.bf16.mxu0 0
        %470 = vmatpush1.bf16.xpose.msra.mxu0 0
        %471 = vmatprep.subr.bf16.mxu0 0
        %472 = vmatpush1.bf16.xpose.msra.mxu0 0
        %473 = vmatprep.subr.bf16.mxu0 0
        %474 = vmatpush1.bf16.xpose.msra.mxu0 0
        %475 = vmatprep.subr.bf16.mxu0 0
        %476 = vmatpush1.bf16.xpose.msra.mxu0 %v459
        %477 = vmatprep.subr.bf16.mxu0 0
        %478 = vmatpush2.bf16.xpose.msra.mxu0 0
        %479 = vmatprep.subr.bf16.mxu0 0
        %480 = vmatpush2.bf16.xpose.msra.mxu0 0
        %481 = vmatprep.subr.bf16.mxu0 0
        %482 = vmatpush2.bf16.xpose.msra.mxu0 0
        %483 = vmatprep.subr.bf16.mxu0 0
        %484 = vmatpush2.bf16.xpose.msra.mxu0 0
        %485 = vmatprep.subr.bf16.mxu0 0
        %486 = vmatpush2.bf16.xpose.msra.mxu0 0
        %487 = vmatprep.subr.bf16.mxu0 0
        %488 = vmatpush2.bf16.xpose.msra.mxu0 0
        %489 = vmatprep.subr.bf16.mxu0 0
        %490 = vmatpush2.bf16.xpose.msra.mxu0 0
        %491 = vmatprep.subr.bf16.mxu0 0
        %492 = vmatpush2.bf16.xpose.msra.mxu0 0
        %493 = vmatprep.mubr.bf16.mxu0 0
        %494 = vmatmul.mubr.bf16.gmra.mxu0 %v456
        %v495 = vpop.f32.mrf.mxu0
        %v496 = vadd.f32 0.0, %v495
        %v497 = vpop.f32.mrf.mxu0
        %v498 = vpop.f32.mrf.mxu0
        %v499 = vpop.f32.mrf.mxu0
        %500 = vdwg.mxu0
        %v501 = vsel %vm342, %v496, -inf
        %502 = vmax.xlane.f32.xlu0 %v501
        %v503 = vpop.xlane.xlu0 %502
        %v504 = vsub.f32 %v496, %v503
        %v505 = vmul.f32 %v504, 1.442695
        %v506 = vpow.pop %v505
        %v507 = vsel %vm342, %v506, 0.0
        %508 = vadd.xlane.f32.xlu0 %v507
        %v509 = vpop.xlane.xlu0 %508
        %v510 = vrcp.pop %v509
        %v511 = vmul.f32 %v506, %v510
        %v512 = vpack.c.bf16 %v511, %v511
        %513 = vrot.lane.b32.xlu0 %v338, 56
        %v514 = vpop.permute.xlu0 %513
        %v516 = vsel %vm342, %v512, 0
        %v519 = vsel %vm406, %v514, 0
        %521 = vmatprep.subr.bf16.mxu0 0
        %522 = vmatpush1.bf16.msra.mxu0 0
        %523 = vmatprep.subr.bf16.mxu0 0
        %524 = vmatpush1.bf16.msra.mxu0 0
        %525 = vmatprep.subr.bf16.mxu0 0
        %526 = vmatpush1.bf16.msra.mxu0 0
        %527 = vmatprep.subr.bf16.mxu0 0
        %528 = vmatpush1.bf16.msra.mxu0 0
        %529 = vmatprep.subr.bf16.mxu0 0
        %530 = vmatpush1.bf16.msra.mxu0 0
        %531 = vmatprep.subr.bf16.mxu0 0
        %532 = vmatpush1.bf16.msra.mxu0 0
        %533 = vmatprep.subr.bf16.mxu0 0
        %534 = vmatpush1.bf16.msra.mxu0 0
        %535 = vmatprep.subr.bf16.mxu0 0
        %536 = vmatpush1.bf16.msra.mxu0 %v519
        %537 = vmatprep.subr.bf16.mxu0 0
        %538 = vmatpush2.bf16.msra.mxu0 0
        %539 = vmatprep.subr.bf16.mxu0 0
        %540 = vmatpush2.bf16.msra.mxu0 0
        %541 = vmatprep.subr.bf16.mxu0 0
        %542 = vmatpush2.bf16.msra.mxu0 0
        %543 = vmatprep.subr.bf16.mxu0 0
        %544 = vmatpush2.bf16.msra.mxu0 0
        %545 = vmatprep.subr.bf16.mxu0 0
        %546 = vmatpush2.bf16.msra.mxu0 0
        %547 = vmatprep.subr.bf16.mxu0 0
        %548 = vmatpush2.bf16.msra.mxu0 0
        %549 = vmatprep.subr.bf16.mxu0 0
        %550 = vmatpush2.bf16.msra.mxu0 0
        %551 = vmatprep.subr.bf16.mxu0 0
        %552 = vmatpush2.bf16.msra.mxu0 0
        %553 = vmatprep.mubr.bf16.mxu0 0
        %554 = vmatmul.mubr.bf16.gmra.mxu0 %v516
        %v555 = vpop.f32.mrf.mxu0
        %v556 = vadd.f32 0.0, %v555
        %v557 = vpop.f32.mrf.mxu0
        %v558 = vpop.f32.mrf.mxu0
        %v559 = vpop.f32.mrf.mxu0
        %560 = vdwg.mxu0
        %v561 = vpack.c.bf16 %v556, %v556
        %562 = vrot.lane.b32.xlu0 %v338, 112
        %v563 = vpop.permute.xlu0 %562
        %564 = vrot.lane.b32.xlu0 %v338, 80
        %v565 = vpop.permute.xlu0 %564
        %v567 = vsel %vm342, %v563, 0
        %v570 = vsel %vm342, %v565, 0
        %572 = vmatprep.subr.bf16.mxu0 0
        %573 = vmatpush1.bf16.xpose.msra.mxu0 0
        %574 = vmatprep.subr.bf16.mxu0 0
        %575 = vmatpush1.bf16.xpose.msra.mxu0 0
        %576 = vmatprep.subr.bf16.mxu0 0
        %577 = vmatpush1.bf16.xpose.msra.mxu0 0
        %578 = vmatprep.subr.bf16.mxu0 0
        %579 = vmatpush1.bf16.xpose.msra.mxu0 0
        %580 = vmatprep.subr.bf16.mxu0 0
        %581 = vmatpush1.bf16.xpose.msra.mxu0 0
        %582 = vmatprep.subr.bf16.mxu0 0
        %583 = vmatpush1.bf16.xpose.msra.mxu0 0
        %584 = vmatprep.subr.bf16.mxu0 0
        %585 = vmatpush1.bf16.xpose.msra.mxu0 0
        %586 = vmatprep.subr.bf16.mxu0 0
        %587 = vmatpush1.bf16.xpose.msra.mxu0 %v570
        %588 = vmatprep.subr.bf16.mxu0 0
        %589 = vmatpush2.bf16.xpose.msra.mxu0 0
        %590 = vmatprep.subr.bf16.mxu0 0
        %591 = vmatpush2.bf16.xpose.msra.mxu0 0
        %592 = vmatprep.subr.bf16.mxu0 0
        %593 = vmatpush2.bf16.xpose.msra.mxu0 0
        %594 = vmatprep.subr.bf16.mxu0 0
        %595 = vmatpush2.bf16.xpose.msra.mxu0 0
        %596 = vmatprep.subr.bf16.mxu0 0
        %597 = vmatpush2.bf16.xpose.msra.mxu0 0
        %598 = vmatprep.subr.bf16.mxu0 0
        %599 = vmatpush2.bf16.xpose.msra.mxu0 0
        %600 = vmatprep.subr.bf16.mxu0 0
        %601 = vmatpush2.bf16.xpose.msra.mxu0 0
        %602 = vmatprep.subr.bf16.mxu0 0
        %603 = vmatpush2.bf16.xpose.msra.mxu0 0
        %604 = vmatprep.mubr.bf16.mxu0 0
        %605 = vmatmul.mubr.bf16.gmra.mxu0 %v567
        %v606 = vpop.f32.mrf.mxu0
        %v607 = vadd.f32 0.0, %v606
        %v608 = vpop.f32.mrf.mxu0
        %v609 = vpop.f32.mrf.mxu0
        %v610 = vpop.f32.mrf.mxu0
        %611 = vdwg.mxu0
        %v612 = vsel %vm342, %v607, -inf
        %613 = vmax.xlane.f32.xlu0 %v612
        %v614 = vpop.xlane.xlu0 %613
        %v615 = vsub.f32 %v607, %v614
        %v616 = vmul.f32 %v615, 1.442695
        %v617 = vpow.pop %v616
        %v618 = vsel %vm342, %v617, 0.0
        %619 = vadd.xlane.f32.xlu0 %v618
        %v620 = vpop.xlane.xlu0 %619
        %v621 = vrcp.pop %v620
        %v622 = vmul.f32 %v617, %v621
        %v623 = vpack.c.bf16 %v622, %v622
        %624 = vrot.lane.b32.xlu0 %v338, 48
        %v625 = vpop.permute.xlu0 %624
        %v627 = vsel %vm342, %v623, 0
        %v630 = vsel %vm406, %v625, 0
        %632 = vmatprep.subr.bf16.mxu0 0
        %633 = vmatpush1.bf16.msra.mxu0 0
        %634 = vmatprep.subr.bf16.mxu0 0
        %635 = vmatpush1.bf16.msra.mxu0 0
        %636 = vmatprep.subr.bf16.mxu0 0
        %637 = vmatpush1.bf16.msra.mxu0 0
        %638 = vmatprep.subr.bf16.mxu0 0
        %639 = vmatpush1.bf16.msra.mxu0 0
        %640 = vmatprep.subr.bf16.mxu0 0
        %641 = vmatpush1.bf16.msra.mxu0 0
        %642 = vmatprep.subr.bf16.mxu0 0
        %643 = vmatpush1.bf16.msra.mxu0 0
        %644 = vmatprep.subr.bf16.mxu0 0
        %645 = vmatpush1.bf16.msra.mxu0 0
        %646 = vmatprep.subr.bf16.mxu0 0
        %647 = vmatpush1.bf16.msra.mxu0 %v630
        %648 = vmatprep.subr.bf16.mxu0 0
        %649 = vmatpush2.bf16.msra.mxu0 0
        %650 = vmatprep.subr.bf16.mxu0 0
        %651 = vmatpush2.bf16.msra.mxu0 0
        %652 = vmatprep.subr.bf16.mxu0 0
        %653 = vmatpush2.bf16.msra.mxu0 0
        %654 = vmatprep.subr.bf16.mxu0 0
        %655 = vmatpush2.bf16.msra.mxu0 0
        %656 = vmatprep.subr.bf16.mxu0 0
        %657 = vmatpush2.bf16.msra.mxu0 0
        %658 = vmatprep.subr.bf16.mxu0 0
        %659 = vmatpush2.bf16.msra.mxu0 0
        %660 = vmatprep.subr.bf16.mxu0 0
        %661 = vmatpush2.bf16.msra.mxu0 0
        %662 = vmatprep.subr.bf16.mxu0 0
        %663 = vmatpush2.bf16.msra.mxu0 0
        %664 = vmatprep.mubr.bf16.mxu0 0
        %665 = vmatmul.mubr.bf16.gmra.mxu0 %v627
        %v666 = vpop.f32.mrf.mxu0
        %v667 = vadd.f32 0.0, %v666
        %v668 = vpop.f32.mrf.mxu0
        %v669 = vpop.f32.mrf.mxu0
        %v670 = vpop.f32.mrf.mxu0
        %671 = vdwg.mxu0
        %v672 = vpack.c.bf16 %v667, %v667
        %673 = vrot.lane.b32.xlu0 %v338, 104
        %v674 = vpop.permute.xlu0 %673
        %675 = vrot.lane.b32.xlu0 %v338, 72
        %v676 = vpop.permute.xlu0 %675
        %v678 = vsel %vm342, %v674, 0
        %v681 = vsel %vm342, %v676, 0
        %683 = vmatprep.subr.bf16.mxu0 0
        %684 = vmatpush1.bf16.xpose.msra.mxu0 0
        %685 = vmatprep.subr.bf16.mxu0 0
        %686 = vmatpush1.bf16.xpose.msra.mxu0 0
        %687 = vmatprep.subr.bf16.mxu0 0
        %688 = vmatpush1.bf16.xpose.msra.mxu0 0
        %689 = vmatprep.subr.bf16.mxu0 0
        %690 = vmatpush1.bf16.xpose.msra.mxu0 0
        %691 = vmatprep.subr.bf16.mxu0 0
        %692 = vmatpush1.bf16.xpose.msra.mxu0 0
        %693 = vmatprep.subr.bf16.mxu0 0
        %694 = vmatpush1.bf16.xpose.msra.mxu0 0
        %695 = vmatprep.subr.bf16.mxu0 0
        %696 = vmatpush1.bf16.xpose.msra.mxu0 0
        %697 = vmatprep.subr.bf16.mxu0 0
        %698 = vmatpush1.bf16.xpose.msra.mxu0 %v681
        %699 = vmatprep.subr.bf16.mxu0 0
        %700 = vmatpush2.bf16.xpose.msra.mxu0 0
        %701 = vmatprep.subr.bf16.mxu0 0
        %702 = vmatpush2.bf16.xpose.msra.mxu0 0
        %703 = vmatprep.subr.bf16.mxu0 0
        %704 = vmatpush2.bf16.xpose.msra.mxu0 0
        %705 = vmatprep.subr.bf16.mxu0 0
        %706 = vmatpush2.bf16.xpose.msra.mxu0 0
        %707 = vmatprep.subr.bf16.mxu0 0
        %708 = vmatpush2.bf16.xpose.msra.mxu0 0
        %709 = vmatprep.subr.bf16.mxu0 0
        %710 = vmatpush2.bf16.xpose.msra.mxu0 0
        %711 = vmatprep.subr.bf16.mxu0 0
        %712 = vmatpush2.bf16.xpose.msra.mxu0 0
        %713 = vmatprep.subr.bf16.mxu0 0
        %714 = vmatpush2.bf16.xpose.msra.mxu0 0
        %715 = vmatprep.mubr.bf16.mxu0 0
        %716 = vmatmul.mubr.bf16.gmra.mxu0 %v678
        %v717 = vpop.f32.mrf.mxu0
        %v718 = vadd.f32 0.0, %v717
        %v719 = vpop.f32.mrf.mxu0
        %v720 = vpop.f32.mrf.mxu0
        %v721 = vpop.f32.mrf.mxu0
        %722 = vdwg.mxu0
        %v723 = vsel %vm342, %v718, -inf
        %724 = vmax.xlane.f32.xlu0 %v723
        %v725 = vpop.xlane.xlu0 %724
        %v726 = vsub.f32 %v718, %v725
        %v727 = vmul.f32 %v726, 1.442695
        %v728 = vpow.pop %v727
        %v729 = vsel %vm342, %v728, 0.0
        %730 = vadd.xlane.f32.xlu0 %v729
        %v731 = vpop.xlane.xlu0 %730
        %v732 = vrcp.pop %v731
        %v733 = vmul.f32 %v728, %v732
        %v734 = vpack.c.bf16 %v733, %v733
        %735 = vrot.lane.b32.xlu0 %v338, 40
        %v736 = vpop.permute.xlu0 %735
        %v738 = vsel %vm342, %v734, 0
        %v741 = vsel %vm406, %v736, 0
        %743 = vmatprep.subr.bf16.mxu0 0
        %744 = vmatpush1.bf16.msra.mxu0 0
        %745 = vmatprep.subr.bf16.mxu0 0
        %746 = vmatpush1.bf16.msra.mxu0 0
        %747 = vmatprep.subr.bf16.mxu0 0
        %748 = vmatpush1.bf16.msra.mxu0 0
        %749 = vmatprep.subr.bf16.mxu0 0
        %750 = vmatpush1.bf16.msra.mxu0 0
        %751 = vmatprep.subr.bf16.mxu0 0
        %752 = vmatpush1.bf16.msra.mxu0 0
        %753 = vmatprep.subr.bf16.mxu0 0
        %754 = vmatpush1.bf16.msra.mxu0 0
        %755 = vmatprep.subr.bf16.mxu0 0
        %756 = vmatpush1.bf16.msra.mxu0 0
        %757 = vmatprep.subr.bf16.mxu0 0
        %758 = vmatpush1.bf16.msra.mxu0 %v741
        %759 = vmatprep.subr.bf16.mxu0 0
        %760 = vmatpush2.bf16.msra.mxu0 0
        %761 = vmatprep.subr.bf16.mxu0 0
        %762 = vmatpush2.bf16.msra.mxu0 0
        %763 = vmatprep.subr.bf16.mxu0 0
        %764 = vmatpush2.bf16.msra.mxu0 0
        %765 = vmatprep.subr.bf16.mxu0 0
        %766 = vmatpush2.bf16.msra.mxu0 0
        %767 = vmatprep.subr.bf16.mxu0 0
        %768 = vmatpush2.bf16.msra.mxu0 0
        %769 = vmatprep.subr.bf16.mxu0 0
        %770 = vmatpush2.bf16.msra.mxu0 0
        %771 = vmatprep.subr.bf16.mxu0 0
        %772 = vmatpush2.bf16.msra.mxu0 0
        %773 = vmatprep.subr.bf16.mxu0 0
        %774 = vmatpush2.bf16.msra.mxu0 0
        %775 = vmatprep.mubr.bf16.mxu0 0
        %776 = vmatmul.mubr.bf16.gmra.mxu0 %v738
        %v777 = vpop.f32.mrf.mxu0
        %v778 = vadd.f32 0.0, %v777
        %v779 = vpop.f32.mrf.mxu0
        %v780 = vpop.f32.mrf.mxu0
        %v781 = vpop.f32.mrf.mxu0
        %782 = vdwg.mxu0
        %v783 = vpack.c.bf16 %v778, %v778
        %785 = vrot.lane.b32.xlu0 %v561, 8
        %v786 = vpop.permute.xlu0 %785
        %788 = vrot.lane.b32.xlu0 %v672, 16
        %v789 = vpop.permute.xlu0 %788
        %791 = vrot.lane.b32.xlu0 %v783, 24
        %v792 = vpop.permute.xlu0 %791
        %v795 = vsel %vm342, %v450, %v786
        %vm796 = vcmask 130048
        %v798 = vsel %vm796, %v795, %v789
        %vm799 = vcmask 195584
        %v801 = vsel %vm799, %v798, %v792
        %v802 = vld [vmem:[#allocation7] sm:$0xf]
        %v803 = vld [vmem:[#allocation7 + $0x4] sm:$0xf]
        %v804 = vld [vmem:[#allocation7 + $0x8] sm:$0xf]
        %v805 = vld [vmem:[#allocation7 + $0xc] sm:$0xf]
        %v806 = vld [vmem:[%s4] sm:$0x1]
        %v808 = vlaneseq
        %v809 = vshrl.u32 %v808, 7
        %v810 = vsub.s32 0, %v809
        %v811 = vrot.slane %v806, %v810
        %v817 = vunpack.c.l.b16 %v802
        %v818 = vunpack.c.l.b16 %v803
        %v819 = vunpack.c.l.b16 %v804
        %v820 = vunpack.c.l.b16 %v805
        %v821 = vpack.c.b16 %v818, %v817
        %v822 = vpack.c.b16 %v820, %v819
        %v825 = vsel %vm294, %v801, 0
        %827 = vmatprep.subr.bf16.mxu0 0
        %828 = vmatpush1.bf16.msra.mxu0 0
        %829 = vmatprep.subr.bf16.mxu0 0
        %830 = vmatpush1.bf16.msra.mxu0 0
        %831 = vmatprep.subr.bf16.mxu0 0
        %832 = vmatpush1.bf16.msra.mxu0 0
        %833 = vmatprep.subr.bf16.mxu0 0
        %834 = vmatpush1.bf16.msra.mxu0 0
        %835 = vmatprep.subr.bf16.mxu0 0
        %836 = vmatpush1.bf16.msra.mxu0 0
        %837 = vmatprep.subr.bf16.mxu0 0
        %838 = vmatpush1.bf16.msra.mxu0 0
        %839 = vmatprep.subr.bf16.mxu0 0
        %840 = vmatpush1.bf16.msra.mxu0 %v822
        %841 = vmatprep.subr.bf16.mxu0 0
        %842 = vmatpush1.bf16.msra.mxu0 %v821
        %843 = vmatprep.subr.bf16.mxu0 0
        %844 = vmatpush2.bf16.msra.mxu0 0
        %845 = vmatprep.subr.bf16.mxu0 0
        %846 = vmatpush2.bf16.msra.mxu0 0
        %847 = vmatprep.subr.bf16.mxu0 0
        %848 = vmatpush2.bf16.msra.mxu0 0
        %849 = vmatprep.subr.bf16.mxu0 0
        %850 = vmatpush2.bf16.msra.mxu0 0
        %851 = vmatprep.subr.bf16.mxu0 0
        %852 = vmatpush2.bf16.msra.mxu0 0
        %853 = vmatprep.subr.bf16.mxu0 0
        %854 = vmatpush2.bf16.msra.mxu0 0
        %855 = vmatprep.subr.bf16.mxu0 0
        %856 = vmatpush2.bf16.msra.mxu0 0
        %857 = vmatprep.subr.bf16.mxu0 0
        %858 = vmatpush2.bf16.msra.mxu0 0
        %859 = vmatprep.mubr.bf16.mxu0 0
        %860 = vmatmul.mubr.bf16.gmra.mxu0 %v825
        %v861 = vpop.f32.mrf.mxu0
        %v862 = vadd.f32 %v811, %v861
        %v863 = vpop.f32.mrf.mxu0
        %v864 = vpop.f32.mrf.mxu0
        %v865 = vpop.f32.mrf.mxu0
        %866 = vdwg.mxu0
        %867 = vst.msk [vmem:[%s268] sm:$0xff] %vm294, %v862
        %s868 = sand.u32 %s141, 1
        %s869 = scalar_lea.sflag [#allocation4], %s868
        %s870 = sand.u32 %s141, 1
        %s871 = smul.addr %s870, 8
        %s872 = scalar_lea.vmem [#allocation8], %s871
        // Predicated region
        $region53: #{tpu_custom_call.1} parent=39 // pred_check
          %p873 = pneg %p151
        $region54: #{tpu_custom_call.1} parent=39 // pred_check_branch
          %875 = sbr.rel (%p873) target = $region56
        $region55: #{tpu_custom_call.1} parent=39 // pred_region
          %s877 = ssub.s32 128, 128
          %878 = vsyncadd %s869, %s877
          %s879 = smul.addr %s23, 128
          %s880 = scalar_lea.hbm %s5, %s879
          %s882 = sshll.u32 %s872, 4
          %s883 = int_to_ptr.vmem [resolvable:$true] %s882
          %885 = dma.vmem_to_hbm [thread:$0]  %s883, 128, %s880, %s869
        $region56: #{tpu_custom_call.1} parent=39 // pred_fallthru
          _
      $region40: #{tpu_custom_call.1} parent=5 // pred_fallthru
        _
      %p886 = scmp.le.s32.totalorder 2, %s18
      // Predicated region
      $region57: #{tpu_custom_call.1} parent=5 // pred_check
        %p887 = pneg %p886
      $region58: #{tpu_custom_call.1} parent=5 // pred_check_branch
        %889 = sbr.rel (%p887) target = $region60
      $region59: #{tpu_custom_call.1} parent=5 // pred_region
        %s890 = ssub.s32 %s18, 2
        // Predicated region
        $region61: #{tpu_custom_call.1} parent=59 // pred_check
          %p891 = pneg %p157
        $region62: #{tpu_custom_call.1} parent=59 // pred_check_branch
          %893 = sbr.rel (%p891) target = $region64
        $region63: #{tpu_custom_call.1} parent=59 // pred_region
          %s894 = sand.u32 %s142, 1
          %s895 = scalar_lea.sflag [#allocation4], %s894
          %s896 = sand.u32 %s142, 1
          %s897 = smul.addr %s896, 8
          %s898 = scalar_lea.vmem [#allocation8], %s897
          %899 = dma.done %s895, 128
        $region64: #{tpu_custom_call.1} parent=59 // pred_fallthru
          _
      $region60: #{tpu_custom_call.1} parent=5 // pred_fallthru
        _
    $region6: #{tpu_custom_call.1} parent=1 // loop_footer
      %s22 = sadd.s32 1, %s18
    $region7: #{tpu_custom_call.1} parent=1 // loop_footer_branch
      %17 = sbr.rel target = $region3
    $region8: #{tpu_custom_call.1} parent=1 // loop_exit
      _
    %900 = vsyncpa [#allocation3], 1
    %s901 = scalar_lea.sflag [#allocation3], 1
    %902 = vsyncpa %s901, 1
    %903 = vsyncpa [#allocation6], 1
    %904 = vsyncpa [#allocation4], 1
    %s905 = scalar_lea.sflag [#allocation4], 1
    %906 = vsyncpa %s905, 1

</llo_original>
